<compile_context>
chip_gen: v7x
topology: tpu7x:2x2x1
jax: 0.10.0
libtpu: 0.0.40
codegen_flags: <defaults>
</compile_context>

<pallas_src>
import functools

import jax
import jax.numpy as jnp
from jax import lax
from jax.experimental import pallas as pl
from jax.experimental.pallas import tpu as pltpu


def cbow_kernel(idx_ref, in_w_ref, out_w_ref, loss_ref, *, C, K, V):
    # idx_ref : (TB, C+1+K) int32, packed columns [ctx(0:C), target(C), neg(C+1:)]
    # in_w_ref / out_w_ref : (V, D) float32 (resident, same block every step)
    # loss_ref: (1, TB) float32 — lane-dense per-example loss row for this tile
    TB = idx_ref.shape[0]
    f32 = jnp.float32

    idx = idx_ref[...]                                     # (TB, C+1+K)
    in_w = in_w_ref[...]                                   # (V, D)
    out_w = out_w_ref[...]                                 # (V, D)

    # Vocab iota along the lane axis; reused for every one-hot below.
    v_iota = lax.broadcasted_iota(jnp.int32, (TB, V), 1)   # (TB, V)

    # ---- context mean: one-hot counts @ in_embed (MXU matmul #1) ----
    ctx_counts = jnp.zeros((TB, V), jnp.int32)
    for c in range(C):                                     # static unroll (C small)
        ctx_counts = ctx_counts + (idx[:, c:c + 1] == v_iota).astype(jnp.int32)
    ctx_mean = jnp.dot(ctx_counts.astype(f32), in_w,
                       preferred_element_type=f32) * f32(1.0 / C)   # (TB, D)

    # ---- all-vocab scores: ctx_mean @ out_embed^T (MXU matmul #2) ----
    scores = lax.dot_general(ctx_mean, out_w, (((1,), (1,)), ((), ())),
                             preferred_element_type=f32)            # (TB, V)

    # ---- extract the K+1 needed scores via one-hot select + lane reduce ----
    cols = []
    tgt_oh = idx[:, C:C + 1] == v_iota                     # (TB, V) bool
    cols.append(jnp.sum(jnp.where(tgt_oh, scores, f32(0.0)),
                        axis=1, keepdims=True))            # +pos score
    for k in range(K):                                     # static unroll (K small)
        noh = idx[:, C + 1 + k:C + 2 + k] == v_iota        # (TB, V) bool
        cols.append(-jnp.sum(jnp.where(noh, scores, f32(0.0)),
                             axis=1, keepdims=True))       # -neg score
    s = jnp.concatenate(cols, axis=1)                      # (TB, K+1)

    # ---- fused loss:  log(1 - sigmoid(x)) == log(sigmoid(-x)) ----
    per_ex = -jnp.sum(jnp.log(jax.nn.sigmoid(s) + 1e-10),
                      axis=1, keepdims=True)               # (TB, 1)

    # Lane-dense store: one XLU transpose instead of 16 masked column stores.
    loss_ref[...] = jnp.transpose(per_ex, (1, 0))          # (1, TB)


def cbow_loss(context_idxs, target_idx, negative_idxs, in_w, out_w, *, tb=512):
    B, C = context_idxs.shape
    K = negative_idxs.shape[1]
    V, D = in_w.shape
    W = C + 1 + K

    # Tile-size policy:
    #  - tiny batches: one tile covering the 8-padded batch (block == full array)
    #  - big batches: TB a multiple of 128 so (tb, W) / (1, tb) blocks tile cleanly;
    #    >= 2 tiles lets the "parallel" grid axis use both v7x TensorCores.
    b8 = pl.cdiv(B, 8) * 8
    if b8 <= tb:
        tb = b8
    else:
        tb = max(128, (tb // 128) * 128)

    b_pad = pl.cdiv(B, tb) * tb
    num_tiles = b_pad // tb

    # Pack the three index arrays into one (b_pad, W) int32 array (one DMA/step).
    packed = jnp.concatenate(
        [context_idxs.astype(jnp.int32),
         target_idx.astype(jnp.int32).reshape(B, 1),
         negative_idxs.astype(jnp.int32)], axis=1)                 # (B, W)
    packed = jnp.pad(packed, ((0, b_pad - B), (0, 0)))             # pad rows -> idx 0

    # VMEM budget computed from the real footprint (with 2x headroom), not a
    # blanket 32 MiB — stays well inside v7x's 64 MiB physical VMEM.
    v_pad = pl.cdiv(V, 8) * 8
    d_pad = pl.cdiv(D, 128) * 128
    w_pad = pl.cdiv(W, 128) * 128
    vl_pad = pl.cdiv(V, 128) * 128
    vmem_bytes = (
        2 * tb * w_pad * 4            # packed indices (double-buffered)
        + 2 * 2 * v_pad * d_pad * 4   # two resident (V, D) tables (double-buffered)
        + 2 * tb * 4                  # (1, tb) output (double-buffered)
        + 10 * tb * vl_pad * 4        # working set: iota / counts / scores / one-hots
    )
    vmem_limit = int(min(64 * 1024 * 1024, max(2 * 1024 * 1024, 2 * vmem_bytes)))

    grid_spec = pl.GridSpec(
        grid=(num_tiles,),
        in_specs=[
            pl.BlockSpec((tb, W), lambda i: (i, 0)),   # packed indices
            pl.BlockSpec((V, D), lambda i: (0, 0)),    # in_embed  (resident)
            pl.BlockSpec((V, D), lambda i: (0, 0)),    # out_embed (resident)
        ],
        out_specs=pl.BlockSpec((1, tb), lambda i: (0, i)),
    )

    per_example = pl.pallas_call(
        functools.partial(cbow_kernel, C=C, K=K, V=V),
        out_shape=jax.ShapeDtypeStruct((1, b_pad), jnp.float32),
        grid_spec=grid_spec,
        compiler_params=pltpu.CompilerParams(
            dimension_semantics=("parallel",),
            vmem_limit_bytes=vmem_limit,
        ),
    )(packed, in_w, out_w)

    # Final mean over the real (unpadded) batch, done in the wrapper.
    return jnp.mean(per_example[0, :B])


def cbow_loss_ref(context_idxs, target_idx, negative_idxs, in_w, out_w):
    # pure-JAX reference mirroring the PyTorch forward
    ce = in_w[context_idxs]                       # (B, C, D)
    cm = ce.mean(axis=1)                          # (B, D)
    te = out_w[target_idx]                        # (B, D)
    pos = jnp.sum(cm * te, axis=1)                # (B,)
    pos_loss = jnp.log(jax.nn.sigmoid(pos) + 1e-10)
    ne = out_w[negative_idxs]                     # (B, K, D)
    ns = jnp.einsum("bkd,bd->bk", ne, cm)         # (B, K)
    neg_loss = jnp.sum(jnp.log(1.0 - jax.nn.sigmoid(ns) + 1e-10), axis=1)
    return jnp.mean(-(pos_loss + neg_loss))


if __name__ == "__main__":
    vocab_size = 50
    embedding_dim = 32
    B, C, K = 2, 4, 5

    key = jax.random.PRNGKey(0)
    k_in, k_out, k_ctx, k_tgt, k_neg = jax.random.split(key, 5)

    # deterministic parameter init (nn.Embedding default ~ N(0, 1))
    in_w = jax.random.normal(k_in, (vocab_size, embedding_dim), jnp.float32)
    out_w = jax.random.normal(k_out, (vocab_size, embedding_dim), jnp.float32)

    context_idxs = jax.random.randint(k_ctx, (B, C), 0, vocab_size, jnp.int32)
    target_idx = jax.random.randint(k_tgt, (B,), 0, vocab_size, jnp.int32)
    negative_idxs = jax.random.randint(k_neg, (B, K), 0, vocab_size, jnp.int32)

    loss = cbow_loss(context_idxs, target_idx, negative_idxs, in_w, out_w)
    loss = jax.block_until_ready(loss)

    ref = cbow_loss_ref(context_idxs, target_idx, negative_idxs, in_w, out_w)
    assert jnp.allclose(loss, ref, rtol=1e-4, atol=1e-4), (loss, ref)

    print("KERNEL_OK")
</pallas_src>

<mosaic_0001>
module attributes {stable_mosaic.version = 11 : i64} {
  func.func @cbow_kernel(%arg0: i32, %arg1: memref<8x10xi32, #tpu.memory_space<vmem>>, %arg2: memref<50x32xf32, #tpu.memory_space<vmem>>, %arg3: memref<50x32xf32, #tpu.memory_space<vmem>>, %arg4: memref<1x8xf32, #tpu.memory_space<vmem>>) attributes {dimension_semantics = [#tpu.dimension_semantics<parallel>], iteration_bounds = array<i64: 1>, scalar_prefetch = 0 : i64, scratch_operands = 0 : i64, tpu.core_type = #tpu.core_type<tc>, window_params = [{transform_indices = @transform_0, window_bounds = array<i64: 8, 10>}, {pipeline_mode = #tpu.pipeline_mode<synchronous>, transform_indices = @transform_1, window_bounds = array<i64: 50, 32>}, {pipeline_mode = #tpu.pipeline_mode<synchronous>, transform_indices = @transform_2, window_bounds = array<i64: 50, 32>}, {transform_indices = @transform_3, window_bounds = array<i64: 1, 8>}]} {
    %c0 = arith.constant 0 : index
    %c0_0 = arith.constant 0 : index
    %0 = vector.load %arg1[%c0, %c0_0] : memref<8x10xi32, #tpu.memory_space<vmem>>, vector<8x10xi32>
    %c0_1 = arith.constant 0 : index
    %c0_2 = arith.constant 0 : index
    %1 = vector.load %arg2[%c0_1, %c0_2] : memref<50x32xf32, #tpu.memory_space<vmem>>, vector<50x32xf32>
    %c0_3 = arith.constant 0 : index
    %c0_4 = arith.constant 0 : index
    %2 = vector.load %arg3[%c0_3, %c0_4] : memref<50x32xf32, #tpu.memory_space<vmem>>, vector<50x32xf32>
    %3 = tpu.iota {dimensions = array<i32: 1>} : vector<8x50xi32>
    %c0_i32 = arith.constant 0 : i32
    %4 = vector.broadcast %c0_i32 : i32 to vector<8x50xi32>
    %5 = vector.extract_strided_slice %0 {offsets = [0, 0], sizes = [8, 1], strides = [1, 1]} : vector<8x10xi32> to vector<8x1xi32>
    %6 = vector.broadcast %5 : vector<8x1xi32> to vector<8x50xi32>
    %7 = arith.cmpi eq, %6, %3 : vector<8x50xi32>
    %8 = arith.extui %7 : vector<8x50xi1> to vector<8x50xi32>
    %9 = arith.addi %4, %8 : vector<8x50xi32>
    %10 = vector.extract_strided_slice %0 {offsets = [0, 1], sizes = [8, 1], strides = [1, 1]} : vector<8x10xi32> to vector<8x1xi32>
    %11 = vector.broadcast %10 : vector<8x1xi32> to vector<8x50xi32>
    %12 = arith.cmpi eq, %11, %3 : vector<8x50xi32>
    %13 = arith.extui %12 : vector<8x50xi1> to vector<8x50xi32>
    %14 = arith.addi %9, %13 : vector<8x50xi32>
    %15 = vector.extract_strided_slice %0 {offsets = [0, 2], sizes = [8, 1], strides = [1, 1]} : vector<8x10xi32> to vector<8x1xi32>
    %16 = vector.broadcast %15 : vector<8x1xi32> to vector<8x50xi32>
    %17 = arith.cmpi eq, %16, %3 : vector<8x50xi32>
    %18 = arith.extui %17 : vector<8x50xi1> to vector<8x50xi32>
    %19 = arith.addi %14, %18 : vector<8x50xi32>
    %20 = vector.extract_strided_slice %0 {offsets = [0, 3], sizes = [8, 1], strides = [1, 1]} : vector<8x10xi32> to vector<8x1xi32>
    %21 = vector.broadcast %20 : vector<8x1xi32> to vector<8x50xi32>
    %22 = arith.cmpi eq, %21, %3 : vector<8x50xi32>
    %23 = arith.extui %22 : vector<8x50xi1> to vector<8x50xi32>
    %24 = arith.addi %19, %23 : vector<8x50xi32>
    %25 = arith.sitofp %24 : vector<8x50xi32> to vector<8x50xf32>
    %cst = arith.constant dense<0.000000e+00> : vector<8x32xf32>
    %26 = tpu.matmul %25, %1, %cst {dimension_numbers = #tpu.dot_dimension_numbers<[1], [0], [0], [1], [0, 0, 1, 1], [], []>} : vector<8x50xf32>, vector<50x32xf32>, vector<8x32xf32> -> vector<8x32xf32>
    %cst_5 = arith.constant 2.500000e-01 : f32
    %27 = vector.broadcast %cst_5 : f32 to vector<8x32xf32>
    %28 = arith.mulf %26, %27 : vector<8x32xf32>
    %cst_6 = arith.constant dense<0.000000e+00> : vector<8x50xf32>
    %29 = tpu.matmul %28, %2, %cst_6 {dimension_numbers = #tpu.dot_dimension_numbers<[1], [1], [0], [0], [0, 0, 1, 0], [], []>} : vector<8x32xf32>, vector<50x32xf32>, vector<8x50xf32> -> vector<8x50xf32>
    %30 = vector.extract_strided_slice %0 {offsets = [0, 4], sizes = [8, 1], strides = [1, 1]} : vector<8x10xi32> to vector<8x1xi32>
    %31 = vector.broadcast %30 : vector<8x1xi32> to vector<8x50xi32>
    %32 = arith.cmpi eq, %31, %3 : vector<8x50xi32>
    %cst_7 = arith.constant 0.000000e+00 : f32
    %33 = vector.broadcast %cst_7 : f32 to vector<8x50xf32>
    %34 = arith.select %32, %29, %33 : vector<8x50xi1>, vector<8x50xf32>
    %cst_8 = arith.constant dense<0.000000e+00> : vector<8xf32>
    %35 = vector.multi_reduction <add>, %34, %cst_8 [1] : vector<8x50xf32> to vector<8xf32>
    %36 = vector.shape_cast %35 : vector<8xf32> to vector<8x1xf32>
    %37 = vector.extract_strided_slice %0 {offsets = [0, 5], sizes = [8, 1], strides = [1, 1]} : vector<8x10xi32> to vector<8x1xi32>
    %38 = vector.broadcast %37 : vector<8x1xi32> to vector<8x50xi32>
    %39 = arith.cmpi eq, %38, %3 : vector<8x50xi32>
    %cst_9 = arith.constant 0.000000e+00 : f32
    %40 = vector.broadcast %cst_9 : f32 to vector<8x50xf32>
    %41 = arith.select %39, %29, %40 : vector<8x50xi1>, vector<8x50xf32>
    %cst_10 = arith.constant dense<0.000000e+00> : vector<8xf32>
    %42 = vector.multi_reduction <add>, %41, %cst_10 [1] : vector<8x50xf32> to vector<8xf32>
    %43 = vector.shape_cast %42 : vector<8xf32> to vector<8x1xf32>
    %cst_11 = arith.constant 0.000000e+00 : f32
    %44 = vector.broadcast %cst_11 : f32 to vector<8x1xf32>
    %45 = arith.subf %44, %43 : vector<8x1xf32>
    %46 = vector.extract_strided_slice %0 {offsets = [0, 6], sizes = [8, 1], strides = [1, 1]} : vector<8x10xi32> to vector<8x1xi32>
    %47 = vector.broadcast %46 : vector<8x1xi32> to vector<8x50xi32>
    %48 = arith.cmpi eq, %47, %3 : vector<8x50xi32>
    %cst_12 = arith.constant 0.000000e+00 : f32
    %49 = vector.broadcast %cst_12 : f32 to vector<8x50xf32>
    %50 = arith.select %48, %29, %49 : vector<8x50xi1>, vector<8x50xf32>
    %cst_13 = arith.constant dense<0.000000e+00> : vector<8xf32>
    %51 = vector.multi_reduction <add>, %50, %cst_13 [1] : vector<8x50xf32> to vector<8xf32>
    %52 = vector.shape_cast %51 : vector<8xf32> to vector<8x1xf32>
    %cst_14 = arith.constant 0.000000e+00 : f32
    %53 = vector.broadcast %cst_14 : f32 to vector<8x1xf32>
    %54 = arith.subf %53, %52 : vector<8x1xf32>
    %55 = vector.extract_strided_slice %0 {offsets = [0, 7], sizes = [8, 1], strides = [1, 1]} : vector<8x10xi32> to vector<8x1xi32>
    %56 = vector.broadcast %55 : vector<8x1xi32> to vector<8x50xi32>
    %57 = arith.cmpi eq, %56, %3 : vector<8x50xi32>
    %cst_15 = arith.constant 0.000000e+00 : f32
    %58 = vector.broadcast %cst_15 : f32 to vector<8x50xf32>
    %59 = arith.select %57, %29, %58 : vector<8x50xi1>, vector<8x50xf32>
    %cst_16 = arith.constant dense<0.000000e+00> : vector<8xf32>
    %60 = vector.multi_reduction <add>, %59, %cst_16 [1] : vector<8x50xf32> to vector<8xf32>
    %61 = vector.shape_cast %60 : vector<8xf32> to vector<8x1xf32>
    %cst_17 = arith.constant 0.000000e+00 : f32
    %62 = vector.broadcast %cst_17 : f32 to vector<8x1xf32>
    %63 = arith.subf %62, %61 : vector<8x1xf32>
    %64 = vector.extract_strided_slice %0 {offsets = [0, 8], sizes = [8, 1], strides = [1, 1]} : vector<8x10xi32> to vector<8x1xi32>
    %65 = vector.broadcast %64 : vector<8x1xi32> to vector<8x50xi32>
    %66 = arith.cmpi eq, %65, %3 : vector<8x50xi32>
    %cst_18 = arith.constant 0.000000e+00 : f32
    %67 = vector.broadcast %cst_18 : f32 to vector<8x50xf32>
    %68 = arith.select %66, %29, %67 : vector<8x50xi1>, vector<8x50xf32>
    %cst_19 = arith.constant dense<0.000000e+00> : vector<8xf32>
    %69 = vector.multi_reduction <add>, %68, %cst_19 [1] : vector<8x50xf32> to vector<8xf32>
    %70 = vector.shape_cast %69 : vector<8xf32> to vector<8x1xf32>
    %cst_20 = arith.constant 0.000000e+00 : f32
    %71 = vector.broadcast %cst_20 : f32 to vector<8x1xf32>
    %72 = arith.subf %71, %70 : vector<8x1xf32>
    %73 = vector.extract_strided_slice %0 {offsets = [0, 9], sizes = [8, 1], strides = [1, 1]} : vector<8x10xi32> to vector<8x1xi32>
    %74 = vector.broadcast %73 : vector<8x1xi32> to vector<8x50xi32>
    %75 = arith.cmpi eq, %74, %3 : vector<8x50xi32>
    %cst_21 = arith.constant 0.000000e+00 : f32
    %76 = vector.broadcast %cst_21 : f32 to vector<8x50xf32>
    %77 = arith.select %75, %29, %76 : vector<8x50xi1>, vector<8x50xf32>
    %cst_22 = arith.constant dense<0.000000e+00> : vector<8xf32>
    %78 = vector.multi_reduction <add>, %77, %cst_22 [1] : vector<8x50xf32> to vector<8xf32>
    %79 = vector.shape_cast %78 : vector<8xf32> to vector<8x1xf32>
    %cst_23 = arith.constant 0.000000e+00 : f32
    %80 = vector.broadcast %cst_23 : f32 to vector<8x1xf32>
    %81 = arith.subf %80, %79 : vector<8x1xf32>
    %82 = tpu.concatenate %36, %45, %54, %63, %72, %81 in 1 : vector<8x1xf32>, vector<8x1xf32>, vector<8x1xf32>, vector<8x1xf32>, vector<8x1xf32>, vector<8x1xf32> -> vector<8x6xf32>
    %83 = arith.negf %82 : vector<8x6xf32>
    %84 = math.exp %83 : vector<8x6xf32>
    %cst_24 = arith.constant 1.000000e+00 : f32
    %85 = vector.broadcast %cst_24 : f32 to vector<8x6xf32>
    %86 = arith.addf %85, %84 : vector<8x6xf32>
    %87 = arith.divf %85, %86 : vector<8x6xf32>
    %cst_25 = arith.constant 1.000000e-10 : f32
    %88 = vector.broadcast %cst_25 : f32 to vector<8x6xf32>
    %89 = arith.addf %87, %88 : vector<8x6xf32>
    %90 = math.log %89 : vector<8x6xf32>
    %cst_26 = arith.constant dense<0.000000e+00> : vector<8xf32>
    %91 = vector.multi_reduction <add>, %90, %cst_26 [1] : vector<8x6xf32> to vector<8xf32>
    %92 = vector.shape_cast %91 : vector<8xf32> to vector<8x1xf32>
    %cst_27 = arith.constant 0.000000e+00 : f32
    %93 = vector.broadcast %cst_27 : f32 to vector<8x1xf32>
    %94 = arith.subf %93, %92 : vector<8x1xf32>
    %95 = tpu.transpose %94, [1, 0] : vector<8x1xf32> -> vector<1x8xf32>
    %c0_28 = arith.constant 0 : index
    %c0_29 = arith.constant 0 : index
    %96 = vector.load %arg4[%c0_28, %c0_29] : memref<1x8xf32, #tpu.memory_space<vmem>>, vector<1x8xf32>
    tpu.vector_store %arg4[%c0_28, %c0_29], %95 {strides = array<i32>} : memref<1x8xf32, #tpu.memory_space<vmem>>, vector<1x8xf32>,
    return
  }
  func.func @transform_0(%arg0: i32) -> (i32, i32) {
    %c0_i32 = arith.constant 0 : i32
    %c0_i32_0 = arith.constant 0 : i32
    return %arg0, %c0_i32 : i32, i32
  }
  func.func @transform_1(%arg0: i32) -> (i32, i32) {
    %c0_i32 = arith.constant 0 : i32
    %c0_i32_0 = arith.constant 0 : i32
    %c0_i32_1 = arith.constant 0 : i32
    return %c0_i32, %c0_i32_0 : i32, i32
  }
  func.func @transform_2(%arg0: i32) -> (i32, i32) {
    %c0_i32 = arith.constant 0 : i32
    %c0_i32_0 = arith.constant 0 : i32
    %c0_i32_1 = arith.constant 0 : i32
    return %c0_i32, %c0_i32_0 : i32, i32
  }
  func.func @transform_3(%arg0: i32) -> (i32, i32) {
    %c0_i32 = arith.constant 0 : i32
    %c0_i32_0 = arith.constant 0 : i32
    return %c0_i32, %arg0 : i32, i32
  }
}

</mosaic_0001>

<llo_original>
// kernel: tpu_custom_call.1
$region0: #{tpu_custom_call.1}
  #allocation0 [shape = 'u32[]', space=smem, size = 0x4, offset = 0x4, fixed_abs, tag = 'smem constant byte address 0x4 - core index']
  #allocation1 [shape = 'u32[144,128]{1,0:T(1,128)}', space=vmem, size = 0x12000, scoped, tag = 'internal scratch']
  %s0 = inlined_call_operand.vmem [shape: s32[8,10], index: 0, kind: input, shape index: {}]
  %s1 = inlined_call_operand.vmem [shape: f32[50,32], index: 1, kind: input, shape index: {}]
  %s2 = inlined_call_operand.vmem [shape: f32[50,32], index: 2, kind: input, shape index: {}]
  %s3 = inlined_call_operand.hbm [shape: f32[1,8], index: 3, kind: output, shape index: {}]
  %s4 = sld [smem:[#allocation0]]
  $region22: #{tpu_custom_call.1} parent=0
    _
  %s6 = ssub.s32 1, %s4
  %s7 = scalar_select 0, %s6, %s4
  $region1: #{tpu_custom_call.1} parent=0
    #allocation2 [shape = 'u8[512]{0}', space=vmem, size = 0x400, scoped, tag = 'output window, operand 0, single buffered']
    #allocation3 [shape = 's32[1]{0}', space=sflag, size = 0x4, scoped, tag = 'scoped memory for tpu_custom_call.1']
    %8 = vsyncpa [#allocation3], 0
    // Predicated region
    $region2: #{tpu_custom_call.1} parent=1 // pred_check
      _
    $region3: #{tpu_custom_call.1} parent=1 // pred_check_branch
      %10 = sbr.rel (0) target = $region5
    $region4: #{tpu_custom_call.1} parent=1 // pred_region
      _
    $region5: #{tpu_custom_call.1} parent=1 // pred_fallthru
      _
    // Predicated region
    $region6: #{tpu_custom_call.1} parent=1 // pred_check
      _
    $region7: #{tpu_custom_call.1} parent=1 // pred_check_branch
      %12 = sbr.rel (0) target = $region9
    $region8: #{tpu_custom_call.1} parent=1 // pred_region
      _
    $region9: #{tpu_custom_call.1} parent=1 // pred_fallthru
      _
    // Predicated region
    $region10: #{tpu_custom_call.1} parent=1 // pred_check
      _
    $region11: #{tpu_custom_call.1} parent=1 // pred_check_branch
      %14 = sbr.rel (0) target = $region13
    $region12: #{tpu_custom_call.1} parent=1 // pred_region
      _
    $region13: #{tpu_custom_call.1} parent=1 // pred_fallthru
      _
    %v15 = vld [vmem:[%s0] sm:$0xff]
    %v16 = vld [vmem:[%s1] sm:$0xff]
    %v17 = vld [vmem:[%s1 + $0x8] sm:$0xff]
    %v18 = vld [vmem:[%s1 + $0x10] sm:$0xff]
    %v19 = vld [vmem:[%s1 + $0x18] sm:$0xff]
    %v20 = vld [vmem:[%s1 + $0x20] sm:$0xff]
    %v21 = vld [vmem:[%s1 + $0x28] sm:$0xff]
    %v22 = vld [vmem:[%s1 + $0x30] sm:$0x3]
    %v23 = vld [vmem:[%s2] sm:$0xff]
    %v24 = vld [vmem:[%s2 + $0x8] sm:$0xff]
    %v25 = vld [vmem:[%s2 + $0x10] sm:$0xff]
    %v26 = vld [vmem:[%s2 + $0x18] sm:$0xff]
    %v27 = vld [vmem:[%s2 + $0x20] sm:$0xff]
    %v28 = vld [vmem:[%s2 + $0x28] sm:$0xff]
    %v29 = vld [vmem:[%s2 + $0x30] sm:$0x3]
    %v30 = vlaneseq
    %v31 = vand.u32 %v30, 127
    %32 = vset.pattern.permute.xlu0 0
    %33 = vperm.xlu0 %32, %v15
    %v34 = vpop.permute.xlu0 %33
    %vm35 = vcmp.eq.s32.totalorder %v34, %v31
    %v36 = vsel %vm35, 1, 0
    %37 = vset.pattern.permute.xlu0 1
    %38 = vperm.xlu0 %37, %v15
    %v39 = vpop.permute.xlu0 %38
    %vm40 = vcmp.eq.s32.totalorder %v39, %v31
    %v41 = vsel %vm40, 1, 0
    %v42 = vadd.s32 %v36, %v41
    %43 = vset.pattern.permute.xlu0 2
    %44 = vperm.xlu0 %43, %v15
    %v45 = vpop.permute.xlu0 %44
    %vm46 = vcmp.eq.s32.totalorder %v45, %v31
    %v47 = vsel %vm46, 1, 0
    %v48 = vadd.s32 %v42, %v47
    %49 = vset.pattern.permute.xlu0 3
    %50 = vperm.xlu0 %49, %v15
    %v51 = vpop.permute.xlu0 %50
    %vm52 = vcmp.eq.s32.totalorder %v51, %v31
    %v53 = vsel %vm52, 1, 0
    %v54 = vadd.s32 %v48, %v53
    %v55 = vcvt.s32.f32 %v54
    %vm56 = vcmask 408576
    %v58 = vsel %vm56, %v55, 0
    %vm60 = vcmask 1041408
    %v62 = vsel %vm60, %v22, 0
    %64 = vmatprep.subr.mxu0 0.0
    %65 = vmatpush1.msra.mxu0 %v16
    %66 = vmatprep.subr.mxu0 0.0
    %67 = vmatpush1.msra.mxu0 %v17
    %68 = vmatprep.subr.mxu0 0.0
    %69 = vmatpush1.msra.mxu0 %v18
    %70 = vmatprep.subr.mxu0 0.0
    %71 = vmatpush1.msra.mxu0 %v19
    %72 = vmatprep.subr.mxu0 0.0
    %73 = vmatpush1.msra.mxu0 %v20
    %74 = vmatprep.subr.mxu0 0.0
    %75 = vmatpush1.msra.mxu0 %v21
    %76 = vmatprep.subr.mxu0 0.0
    %77 = vmatpush1.msra.mxu0 %v62
    %78 = vmatprep.subr.mxu0 0.0
    %79 = vmatpush1.msra.mxu0 0.0
    %80 = vmatprep.subr.mxu0 0.0
    %81 = vmatpush1.msra.mxu0 0.0
    %82 = vmatprep.subr.mxu0 0.0
    %83 = vmatpush1.msra.mxu0 0.0
    %84 = vmatprep.subr.mxu0 0.0
    %85 = vmatpush1.msra.mxu0 0.0
    %86 = vmatprep.subr.mxu0 0.0
    %87 = vmatpush1.msra.mxu0 0.0
    %88 = vmatprep.subr.mxu0 0.0
    %89 = vmatpush1.msra.mxu0 0.0
    %90 = vmatprep.subr.mxu0 0.0
    %91 = vmatpush1.msra.mxu0 0.0
    %92 = vmatprep.subr.mxu0 0.0
    %93 = vmatpush1.msra.mxu0 0.0
    %94 = vmatprep.subr.mxu0 0.0
    %95 = vmatpush1.msra.mxu0 0.0
    %96 = vmatprep.subr.mxu0 0.0
    %97 = vmatpush1.msra.mxu0 0.0
    %98 = vmatprep.subr.mxu0 0.0
    %99 = vmatpush1.msra.mxu0 0.0
    %100 = vmatprep.subr.mxu0 0.0
    %101 = vmatpush1.msra.mxu0 0.0
    %102 = vmatprep.subr.mxu0 0.0
    %103 = vmatpush1.msra.mxu0 0.0
    %104 = vmatprep.subr.mxu0 0.0
    %105 = vmatpush1.msra.mxu0 0.0
    %106 = vmatprep.subr.mxu0 0.0
    %107 = vmatpush1.msra.mxu0 0.0
    %108 = vmatprep.subr.mxu0 0.0
    %109 = vmatpush1.msra.mxu0 0.0
    %110 = vmatprep.subr.mxu0 0.0
    %111 = vmatpush1.msra.mxu0 0.0
    %112 = vmatprep.subr.mxu0 0.0
    %113 = vmatpush1.msra.mxu0 0.0
    %114 = vmatprep.subr.mxu0 0.0
    %115 = vmatpush1.msra.mxu0 0.0
    %116 = vmatprep.subr.mxu0 0.0
    %117 = vmatpush1.msra.mxu0 0.0
    %118 = vmatprep.subr.mxu0 0.0
    %119 = vmatpush1.msra.mxu0 0.0
    %120 = vmatprep.subr.mxu0 0.0
    %121 = vmatpush1.msra.mxu0 0.0
    %122 = vmatprep.subr.mxu0 0.0
    %123 = vmatpush1.msra.mxu0 0.0
    %124 = vmatprep.subr.mxu0 0.0
    %125 = vmatpush1.msra.mxu0 0.0
    %126 = vmatprep.subr.mxu0 0.0
    %127 = vmatpush1.msra.mxu0 0.0
    %128 = vmatprep.mubr.f32.mxu0 0.0
    %129 = vmatmul.mubr.f32.gmra.mrb[0].mxu0 %v58
    %v130 = vpop.f32.mrb[0].mxu0
    %v131 = vadd.f32 0.0, %v130
    %v132 = vpop.f32.mrb[0].mxu0
    %133 = vdwg.mxu0
    %v134 = vmul.f32 %v131, 0.25
    %vm135 = vcmask 261120
    %v137 = vsel %vm135, %v134, 0
    %v140 = vsel %vm135, %v23, 0
    %v143 = vsel %vm135, %v24, 0
    %v146 = vsel %vm135, %v25, 0
    %v149 = vsel %vm135, %v26, 0
    %v152 = vsel %vm135, %v27, 0
    %v155 = vsel %vm135, %v28, 0
    %v158 = vsel %vm135, %v29, 0
    %160 = vmatprep.subr.mxu0 0.0
    %161 = vmatpush1.xpose.msra.mxu0 %v140
    %162 = vmatprep.subr.mxu0 0.0
    %163 = vmatpush1.xpose.msra.mxu0 %v143
    %164 = vmatprep.subr.mxu0 0.0
    %165 = vmatpush1.xpose.msra.mxu0 %v146
    %166 = vmatprep.subr.mxu0 0.0
    %167 = vmatpush1.xpose.msra.mxu0 %v149
    %168 = vmatprep.subr.mxu0 0.0
    %169 = vmatpush1.xpose.msra.mxu0 %v152
    %170 = vmatprep.subr.mxu0 0.0
    %171 = vmatpush1.xpose.msra.mxu0 %v155
    %172 = vmatprep.subr.mxu0 0.0
    %173 = vmatpush1.xpose.msra.mxu0 %v158
    %174 = vmatprep.subr.mxu0 0.0
    %175 = vmatpush1.xpose.msra.mxu0 0.0
    %176 = vmatprep.subr.mxu0 0.0
    %177 = vmatpush1.xpose.msra.mxu0 0.0
    %178 = vmatprep.subr.mxu0 0.0
    %179 = vmatpush1.xpose.msra.mxu0 0.0
    %180 = vmatprep.subr.mxu0 0.0
    %181 = vmatpush1.xpose.msra.mxu0 0.0
    %182 = vmatprep.subr.mxu0 0.0
    %183 = vmatpush1.xpose.msra.mxu0 0.0
    %184 = vmatprep.subr.mxu0 0.0
    %185 = vmatpush1.xpose.msra.mxu0 0.0
    %186 = vmatprep.subr.mxu0 0.0
    %187 = vmatpush1.xpose.msra.mxu0 0.0
    %188 = vmatprep.subr.mxu0 0.0
    %189 = vmatpush1.xpose.msra.mxu0 0.0
    %190 = vmatprep.subr.mxu0 0.0
    %191 = vmatpush1.xpose.msra.mxu0 0.0
    %192 = vmatprep.subr.mxu0 0.0
    %193 = vmatpush1.xpose.msra.mxu0 0.0
    %194 = vmatprep.subr.mxu0 0.0
    %195 = vmatpush1.xpose.msra.mxu0 0.0
    %196 = vmatprep.subr.mxu0 0.0
    %197 = vmatpush1.xpose.msra.mxu0 0.0
    %198 = vmatprep.subr.mxu0 0.0
    %199 = vmatpush1.xpose.msra.mxu0 0.0
    %200 = vmatprep.subr.mxu0 0.0
    %201 = vmatpush1.xpose.msra.mxu0 0.0
    %202 = vmatprep.subr.mxu0 0.0
    %203 = vmatpush1.xpose.msra.mxu0 0.0
    %204 = vmatprep.subr.mxu0 0.0
    %205 = vmatpush1.xpose.msra.mxu0 0.0
    %206 = vmatprep.subr.mxu0 0.0
    %207 = vmatpush1.xpose.msra.mxu0 0.0
    %208 = vmatprep.subr.mxu0 0.0
    %209 = vmatpush1.xpose.msra.mxu0 0.0
    %210 = vmatprep.subr.mxu0 0.0
    %211 = vmatpush1.xpose.msra.mxu0 0.0
    %212 = vmatprep.subr.mxu0 0.0
    %213 = vmatpush1.xpose.msra.mxu0 0.0
    %214 = vmatprep.subr.mxu0 0.0
    %215 = vmatpush1.xpose.msra.mxu0 0.0
    %216 = vmatprep.subr.mxu0 0.0
    %217 = vmatpush1.xpose.msra.mxu0 0.0
    %218 = vmatprep.subr.mxu0 0.0
    %219 = vmatpush1.xpose.msra.mxu0 0.0
    %220 = vmatprep.subr.mxu0 0.0
    %221 = vmatpush1.xpose.msra.mxu0 0.0
    %222 = vmatprep.subr.mxu0 0.0
    %223 = vmatpush1.xpose.msra.mxu0 0.0
    %224 = vmatprep.mubr.f32.mxu0 0.0
    %225 = vmatmul.mubr.f32.gmra.mrb[0].mxu0 %v137
    %v226 = vpop.f32.mrb[0].mxu0
    %v227 = vadd.f32 0.0, %v226
    %v228 = vpop.f32.mrb[0].mxu0
    %229 = vdwg.mxu0
    %230 = vset.pattern.permute.xlu0 4
    %231 = vperm.xlu0 %230, %v15
    %v232 = vpop.permute.xlu0 %231
    %vm233 = vcmp.eq.s32.totalorder %v232, %v31
    %v234 = vsel %vm233, %v227, 0.0
    %v235 = vsel %vm56, %v234, 0.0
    %236 = vadd.xlane.f32.xlu0 %v235
    %v237 = vpop.xlane.xlu0 %236
    %238 = vset.pattern.permute.xlu0 5
    %239 = vperm.xlu0 %238, %v15
    %v240 = vpop.permute.xlu0 %239
    %vm241 = vcmp.eq.s32.totalorder %v240, %v31
    %v242 = vsel %vm241, %v227, 0.0
    %v243 = vsel %vm56, %v242, 0.0
    %244 = vadd.xlane.f32.xlu0 %v243
    %v245 = vpop.xlane.xlu0 %244
    %v246 = vsub.f32 0.0, %v245
    %247 = vset.pattern.permute.xlu0 6
    %248 = vperm.xlu0 %247, %v15
    %v249 = vpop.permute.xlu0 %248
    %vm250 = vcmp.eq.s32.totalorder %v249, %v31
    %v251 = vsel %vm250, %v227, 0.0
    %v252 = vsel %vm56, %v251, 0.0
    %253 = vadd.xlane.f32.xlu0 %v252
    %v254 = vpop.xlane.xlu0 %253
    %v255 = vsub.f32 0.0, %v254
    %256 = vset.pattern.permute.xlu0 7
    %257 = vperm.xlu0 %256, %v15
    %v258 = vpop.permute.xlu0 %257
    %vm259 = vcmp.eq.s32.totalorder %v258, %v31
    %v260 = vsel %vm259, %v227, 0.0
    %v261 = vsel %vm56, %v260, 0.0
    %262 = vadd.xlane.f32.xlu0 %v261
    %v263 = vpop.xlane.xlu0 %262
    %v264 = vsub.f32 0.0, %v263
    %265 = vset.pattern.permute.xlu0 8
    %266 = vperm.xlu0 %265, %v15
    %v267 = vpop.permute.xlu0 %266
    %vm268 = vcmp.eq.s32.totalorder %v267, %v31
    %v269 = vsel %vm268, %v227, 0.0
    %v270 = vsel %vm56, %v269, 0.0
    %271 = vadd.xlane.f32.xlu0 %v270
    %v272 = vpop.xlane.xlu0 %271
    %v273 = vsub.f32 0.0, %v272
    %274 = vset.pattern.permute.xlu0 9
    %275 = vperm.xlu0 %274, %v15
    %v276 = vpop.permute.xlu0 %275
    %vm277 = vcmp.eq.s32.totalorder %v276, %v31
    %v278 = vsel %vm277, %v227, 0.0
    %v279 = vsel %vm56, %v278, 0.0
    %280 = vadd.xlane.f32.xlu0 %v279
    %v281 = vpop.xlane.xlu0 %280
    %v282 = vsub.f32 0.0, %v281
    %vm283 = vcmask 7168
    %v284 = vsel %vm283, %v237, %v246
    %vm285 = vcmask 15360
    %v286 = vsel %vm285, %v284, %v255
    %vm287 = vcmask 23552
    %v288 = vsel %vm287, %v286, %v264
    %vm289 = vcmask 31744
    %v290 = vsel %vm289, %v288, %v273
    %vm291 = vcmask 39936
    %v292 = vsel %vm291, %v290, %v282
    %v293 = vxor.u32 %v292, 2147483648
    %v294 = vmul.f32 %v293, 1.442695
    %v295 = vpow.pop %v294
    %v296 = vadd.f32 %v295, 1.0
    %v297 = vrcp.pop %v296
    %v298 = vmul.f32 1.0, %v297
    %v299 = vadd.f32 %v298, 1e-10
    %v300 = vlog2.pop %v299
    %v301 = vmul.f32 %v300, 0.6931472
    %vm302 = vcmask 48128
    %v303 = vsel %vm302, %v301, 0.0
    %304 = vadd.xlane.f32.xlu0 %v303
    %v305 = vpop.xlane.xlu0 %304
    %v306 = vsub.f32 0.0, %v305
    %307 = vxpose.xlu0.b32.start [1/16] %v306, 128
    %308 = vxpose.xlu0.b32.cont [2/16] 0.0, 128
    %309 = vxpose.xlu0.b32.cont [3/16] 0.0, 128
    %310 = vxpose.xlu0.b32.cont [4/16] 0.0, 128
    %311 = vxpose.xlu0.b32.cont [5/16] 0.0, 128
    %312 = vxpose.xlu0.b32.cont [6/16] 0.0, 128
    %313 = vxpose.xlu0.b32.cont [7/16] 0.0, 128
    %314 = vxpose.xlu0.b32.cont [8/16] 0.0, 128
    %315 = vxpose.xlu0.b32.cont [9/16] 0.0, 128
    %316 = vxpose.xlu0.b32.cont [10/16] 0.0, 128
    %317 = vxpose.xlu0.b32.cont [11/16] 0.0, 128
    %318 = vxpose.xlu0.b32.cont [12/16] 0.0, 128
    %319 = vxpose.xlu0.b32.cont [13/16] 0.0, 128
    %320 = vxpose.xlu0.b32.cont [14/16] 0.0, 128
    %321 = vxpose.xlu0.b32.cont [15/16] 0.0, 128
    %322 = vxpose.xlu0.b32.end [16/16] 0.0, 128
    %v323 = vpop.trf.xlu0
    %v324 = vpop.trf.xlu0
    %v325 = vpop.trf.xlu0
    %v326 = vpop.trf.xlu0
    %v327 = vpop.trf.xlu0
    %v328 = vpop.trf.xlu0
    %v329 = vpop.trf.xlu0
    %v330 = vpop.trf.xlu0
    %v331 = vpop.trf.xlu0
    %v332 = vpop.trf.xlu0
    %v333 = vpop.trf.xlu0
    %v334 = vpop.trf.xlu0
    %v335 = vpop.trf.xlu0
    %v336 = vpop.trf.xlu0
    %v337 = vpop.trf.xlu0
    %v338 = vpop.trf.xlu0
    %vm339 = vcmask 57344
    %340 = vst.msk [vmem:[#allocation2] sm:$0x1] %vm339, %v323
    // Predicated region
    $region14: #{tpu_custom_call.1} parent=1 // pred_check
      _
    $region15: #{tpu_custom_call.1} parent=1 // pred_check_branch
      %342 = sbr.rel (0) target = $region17
    $region16: #{tpu_custom_call.1} parent=1 // pred_region
      %s344 = ssub.s32 16, 16
      %345 = vsyncadd [#allocation3], %s344
      %s347 = sshll.u32 [#allocation2], 4
      %s348 = int_to_ptr.vmem [resolvable:$true] %s347
      %350 = dma.vmem_to_hbm [thread:$0]  %s348, 16, %s3, [#allocation3]
    $region17: #{tpu_custom_call.1} parent=1 // pred_fallthru
      _
    // Predicated region
    $region18: #{tpu_custom_call.1} parent=1 // pred_check
      _
    $region19: #{tpu_custom_call.1} parent=1 // pred_check_branch
      %352 = sbr.rel (0) target = $region21
    $region20: #{tpu_custom_call.1} parent=1 // pred_region
      %353 = dma.done [#allocation3], 16
    $region21: #{tpu_custom_call.1} parent=1 // pred_fallthru
      _
    %354 = vsyncpa [#allocation3], 1

</llo_original>
